<compile_context>
chip_gen: v7x
topology: tpu7x:2x2x1
jax: 0.10.0
libtpu: 0.0.40
codegen_flags: <defaults>
</compile_context>

<pallas_src>
import jax
import jax.numpy as jnp
from jax.experimental import pallas as pl
from jax.experimental.pallas import tpu as pltpu

_LANES = 128  # f32 vreg lane width


def _round_up(x, m):
    return ((x + m - 1) // m) * m


def _default_block_rows():
    """Per-generation streaming tile height (rows of 128 f32 lanes)."""
    try:
        kind = jax.devices()[0].device_kind.lower()
    except Exception:
        return 2048
    if "7" in kind:      # v7x: 4 MiB blocks (~16 MiB resident with in+out double buffering)
        return 8192
    if "v6" in kind:     # v6e: 2 MiB blocks (~8 MiB resident), under 32 MiB scoped VMEM
        return 4096
    return 2048          # v5e & default: 1 MiB blocks, respects 16 MiB scoped VMEM


def _linear_kernel(x_ref, w_ref, b_ref, o_ref):
    # x_ref: (TM, 128) VMEM tile; w_ref: (1,) SMEM f32; b_ref: (1,) SMEM f32.
    # y = x @ W^T + b  ==  x * W[0,0] + b[0]   (broadcasted scalar FMA on the VPU)
    scale = w_ref[0]
    bias = b_ref[0]
    y = x_ref[...].astype(jnp.float32) * scale + bias
    o_ref[...] = y.astype(o_ref.dtype)


def lr_forward(x, w, b, *, block_rows=None):
    """Pallas implementation of lr.forward: y_predict = self.linear(x).

    Args:
      x: (N, 1) float32
      w: (1, 1) float32  (nn.Linear weight)
      b: (1,)   float32  (nn.Linear bias)
    Returns:
      (N, 1) float32
    """
    n = x.shape[0]
    dtype = x.dtype
    if block_rows is None:
        block_rows = _default_block_rows()

    # ---- Lane-dense layout: (N, 1) -> (rows, 128) ----------------------------
    rows = pl.cdiv(n, _LANES)

    # Tile height: sublane-aligned (multiple of 8) or equal to the full dim.
    # Prefer >= 2 grid steps when rows > 8 so both v7x TensorCores get work.
    if rows <= 8:
        tm = rows                                   # full-dim block (alignment rule: equal full dim)
    else:
        tm = min(block_rows, _round_up(rows, 8))
        if tm >= rows:                              # would collapse to a 1-step grid
            tm = _round_up(pl.cdiv(rows, 2), 8)
    grid = (pl.cdiv(rows, tm),)

    total = rows * _LANES
    flat = x.reshape(-1)                            # metadata-only (contiguous)
    pad = total - n
    if pad:
        # Zero pad: 0*w + b is finite; padded outputs are sliced off below.
        flat = jnp.pad(flat, (0, pad))
    x2d = flat.reshape(rows, _LANES)                # metadata-only when pad == 0

    compiler_kwargs = dict(dimension_semantics=("parallel",))
    if pad:
        # Let XLA fuse the pad/reshape producer into the pallas_call input
        # instead of materializing a padded copy in HBM.
        compiler_kwargs["allow_input_fusion"] = [True, False, False]

    out2d = pl.pallas_call(
        _linear_kernel,
        out_shape=jax.ShapeDtypeStruct((rows, _LANES), dtype),
        grid=grid,
        in_specs=[
            pl.BlockSpec((tm, _LANES), lambda i: (i, 0)),          # streamed x tiles
            pl.BlockSpec(memory_space=pltpu.MemorySpace.SMEM),     # W scalar (f32)
            pl.BlockSpec(memory_space=pltpu.MemorySpace.SMEM),     # b scalar (f32)
        ],
        out_specs=pl.BlockSpec((tm, _LANES), lambda i: (i, 0)),
        compiler_params=pltpu.CompilerParams(**compiler_kwargs),
        cost_estimate=pl.CostEstimate(
            flops=2 * total, transcendentals=0, bytes_accessed=8 * total
        ),
    )(x2d, w.reshape(-1).astype(jnp.float32), b.reshape(-1).astype(jnp.float32))

    if pad:
        # Drop the padded tail (only when N is not 128-aligned).
        return out2d.reshape(-1)[:n].reshape(n, 1)
    # Common case: pure metadata reshape, no extra HBM pass.
    return out2d.reshape(n, 1)


if __name__ == "__main__":
    key = jax.random.PRNGKey(0)
    kx, kw, kb = jax.random.split(key, 3)

    # Small, deterministic example consistent with nn.Linear(1, 1): batch=8, feature=1.
    x = jax.random.normal(kx, (8, 1), dtype=jnp.float32)
    w = jax.random.uniform(kw, (1, 1), dtype=jnp.float32, minval=-1.0, maxval=1.0)
    b = jax.random.uniform(kb, (1,), dtype=jnp.float32, minval=-1.0, maxval=1.0)

    y = lr_forward(x, w, b)
    jax.block_until_ready(y)

    y_ref = x @ w.T + b
    assert y.shape == (8, 1)
    assert jnp.allclose(y, y_ref, atol=1e-6), "mismatch vs reference"

    # Also exercise the 128-aligned zero-copy path with a multi-step grid.
    x_big = jax.random.normal(kx, (4096, 1), dtype=jnp.float32)
    y_big = lr_forward(x_big, w, b)
    jax.block_until_ready(y_big)
    assert jnp.allclose(y_big, x_big @ w.T + b, atol=1e-6), "mismatch vs reference (big)"

    print("KERNEL_OK")
</pallas_src>

<mosaic_0001>
module attributes {stable_mosaic.version = 11 : i64} {
  func.func @_linear_kernel(%arg0: i32, %arg1: memref<1x128xf32, #tpu.memory_space<vmem>>, %arg2: memref<1xf32, #tpu.memory_space<smem>>, %arg3: memref<1xf32, #tpu.memory_space<smem>>, %arg4: memref<1x128xf32, #tpu.memory_space<vmem>>) attributes {dimension_semantics = [#tpu.dimension_semantics<parallel>], iteration_bounds = array<i64: 1>, scalar_prefetch = 0 : i64, scratch_operands = 0 : i64, tpu.core_type = #tpu.core_type<tc>, window_params = [{transform_indices = @transform_0, window_bounds = array<i64: 1, 128>}, {transform_indices = @transform_1, window_bounds = array<i64: 1>}, {transform_indices = @transform_2, window_bounds = array<i64: 1>}, {transform_indices = @transform_3, window_bounds = array<i64: 1, 128>}]} {
    %c0 = arith.constant 0 : index
    %0 = memref.load %arg2[%c0] : memref<1xf32, #tpu.memory_space<smem>>
    %c0_0 = arith.constant 0 : index
    %1 = memref.load %arg3[%c0_0] : memref<1xf32, #tpu.memory_space<smem>>
    %c0_1 = arith.constant 0 : index
    %c0_2 = arith.constant 0 : index
    %2 = vector.load %arg1[%c0_1, %c0_2] : memref<1x128xf32, #tpu.memory_space<vmem>>, vector<1x128xf32>
    %3 = vector.broadcast %0 : f32 to vector<1x128xf32>
    %4 = arith.mulf %2, %3 : vector<1x128xf32>
    %5 = vector.broadcast %1 : f32 to vector<1x128xf32>
    %6 = arith.addf %4, %5 : vector<1x128xf32>
    %c0_3 = arith.constant 0 : index
    %c0_4 = arith.constant 0 : index
    %7 = vector.load %arg4[%c0_3, %c0_4] : memref<1x128xf32, #tpu.memory_space<vmem>>, vector<1x128xf32>
    tpu.vector_store %arg4[%c0_3, %c0_4], %6 {strides = array<i32>} : memref<1x128xf32, #tpu.memory_space<vmem>>, vector<1x128xf32>,
    return
  }
  func.func @transform_0(%arg0: i32) -> (i32, i32) {
    %c0_i32 = arith.constant 0 : i32
    %c0_i32_0 = arith.constant 0 : i32
    return %arg0, %c0_i32 : i32, i32
  }
  func.func @transform_1(%arg0: i32) -> i32 {
    %c0_i32 = arith.constant 0 : i32
    %c0_i32_0 = arith.constant 0 : i32
    return %c0_i32 : i32
  }
  func.func @transform_2(%arg0: i32) -> i32 {
    %c0_i32 = arith.constant 0 : i32
    %c0_i32_0 = arith.constant 0 : i32
    return %c0_i32 : i32
  }
  func.func @transform_3(%arg0: i32) -> (i32, i32) {
    %c0_i32 = arith.constant 0 : i32
    %c0_i32_0 = arith.constant 0 : i32
    return %arg0, %c0_i32 : i32, i32
  }
}

</mosaic_0001>

<llo_original>
// kernel: tpu_custom_call.1
$region0: #{tpu_custom_call.1}
  #allocation0 [shape = 'u32[]', space=smem, size = 0x4, offset = 0x4, fixed_abs, tag = 'smem constant byte address 0x4 - core index']
  #allocation1 [shape = 'u32[144,128]{1,0:T(1,128)}', space=vmem, size = 0x12000, scoped, tag = 'internal scratch']
  #allocation2 [shape = 'f32[1]{0:T(128)S(6)}', space=smem, size = 0x200, scoped, tag = 'scoped memory for tpu_custom_call.1']
  #allocation3 [shape = 'f32[1]{0:T(128)S(6)}', space=smem, size = 0x200, scoped, tag = 'scoped memory for tpu_custom_call.1']
  %s0 = inlined_call_operand.vmem [shape: f32[1,128], index: 0, kind: input, shape index: {}]
  %s1 = inlined_call_operand.<no memory space> [shape: f32[1], index: 1, kind: input, shape index: {}]
  %s2 = inlined_call_operand.<no memory space> [shape: f32[1], index: 2, kind: input, shape index: {}]
  %s3 = inlined_call_operand.hbm [shape: f32[1,128], index: 3, kind: output, shape index: {}]
  %s4 = sld [smem:[#allocation0]]
  $region22: #{tpu_custom_call.1} parent=0
    _
  %s6 = ssub.s32 1, %s4
  %s7 = scalar_select 0, %s6, %s4
  %8 = sst [smem:[#allocation2]] %s1
  %9 = sst [smem:[#allocation3]] %s2
  $region1: #{tpu_custom_call.1} parent=0
    #allocation4 [shape = 'u8[512]{0}', space=vmem, size = 0x400, scoped, tag = 'output window, operand 0, single buffered']
    #allocation5 [shape = 's32[1]{0}', space=sflag, size = 0x4, scoped, tag = 'scoped memory for tpu_custom_call.1']
    %10 = vsyncpa [#allocation5], 0
    // Predicated region
    $region2: #{tpu_custom_call.1} parent=1 // pred_check
      _
    $region3: #{tpu_custom_call.1} parent=1 // pred_check_branch
      %12 = sbr.rel (0) target = $region5
    $region4: #{tpu_custom_call.1} parent=1 // pred_region
      _
    $region5: #{tpu_custom_call.1} parent=1 // pred_fallthru
      _
    // Predicated region
    $region6: #{tpu_custom_call.1} parent=1 // pred_check
      _
    $region7: #{tpu_custom_call.1} parent=1 // pred_check_branch
      %14 = sbr.rel (0) target = $region9
    $region8: #{tpu_custom_call.1} parent=1 // pred_region
      _
    $region9: #{tpu_custom_call.1} parent=1 // pred_fallthru
      _
    // Predicated region
    $region10: #{tpu_custom_call.1} parent=1 // pred_check
      _
    $region11: #{tpu_custom_call.1} parent=1 // pred_check_branch
      %16 = sbr.rel (0) target = $region13
    $region12: #{tpu_custom_call.1} parent=1 // pred_region
      _
    $region13: #{tpu_custom_call.1} parent=1 // pred_fallthru
      _
    %s17 = sld [smem:[#allocation2]]
    %s18 = sld [smem:[#allocation3]]
    %v19 = vld [vmem:[%s0] sm:$0x1]
    %v20 = vstv %s17
    %v21 = vmul.f32 %v19, %v20
    %v22 = vstv %s18
    %v23 = vadd.f32 %v21, %v22
    %24 = vst [vmem:[#allocation4] sm:$0x1] %v23
    // Predicated region
    $region14: #{tpu_custom_call.1} parent=1 // pred_check
      _
    $region15: #{tpu_custom_call.1} parent=1 // pred_check_branch
      %26 = sbr.rel (0) target = $region17
    $region16: #{tpu_custom_call.1} parent=1 // pred_region
      %s28 = ssub.s32 16, 16
      %29 = vsyncadd [#allocation5], %s28
      %s31 = sshll.u32 [#allocation4], 4
      %s32 = int_to_ptr.vmem [resolvable:$true] %s31
      %34 = dma.vmem_to_hbm [thread:$0]  %s32, 16, %s3, [#allocation5]
    $region17: #{tpu_custom_call.1} parent=1 // pred_fallthru
      _
    // Predicated region
    $region18: #{tpu_custom_call.1} parent=1 // pred_check
      _
    $region19: #{tpu_custom_call.1} parent=1 // pred_check_branch
      %36 = sbr.rel (0) target = $region21
    $region20: #{tpu_custom_call.1} parent=1 // pred_region
      %37 = dma.done [#allocation5], 16
    $region21: #{tpu_custom_call.1} parent=1 // pred_fallthru
      _
    %38 = vsyncpa [#allocation5], 1

</llo_original>
